<compile_context>
chip_gen: v6e
topology: v6e:2x2x1
jax: 0.10.0
libtpu: 0.0.40
codegen_flags: <defaults>
</compile_context>

<pallas_src>
import functools

import jax
import jax.numpy as jnp
from jax import lax
from jax.experimental import pallas as pl
from jax.experimental.pallas import tpu as pltpu

# ----------------------------- hyper-params ---------------------------------
FEATURES_SET = ["open", "high", "low", "close"]
INPUT_SIZE = len(FEATURES_SET)   # 4
HIDDEN_SIZE = 1                  # HyperParams.Model.RNN.hidden_size
NUM_LAYERS = 1

LANES = 128          # batch lives on lanes (tiled: any B supported)
N_GATES = 4          # i, f, g(cell), o
T_CHUNK_MAX = 256    # time steps per grid step (bounds VMEM, keeps prefetch)


# ------------------------------- kernel -------------------------------------
def _lstm_kernel(z_ref, whh_ref, h_out_ref, h_scr, c_scr, *, t_total):
    """One (batch-tile, time-chunk) grid step of the H=1 LSTM recurrence.

    z_ref   : VMEM (4, t_chunk, 128) gate-major pre-activations
              z[g, t, b] = x[b,t,:] @ W_ih[g,:] + b_ih[g] + b_hh[g]
    whh_ref : SMEM (4,)              recurrent scalars W_hh[g, 0]
    h_out   : VMEM (1, 128)          final hidden state, batch on lanes
    h_scr/c_scr : VMEM (1, 128)      state carried across time chunks
    """
    t_blk = pl.program_id(1)
    t_chunk = z_ref.shape[1]

    @pl.when(t_blk == 0)
    def _init():
        h_scr[...] = jnp.zeros_like(h_scr)
        c_scr[...] = jnp.zeros_like(c_scr)

    # Recurrent weights: 4 scalars straight from SMEM (sreg operands) — no
    # vreg slab, no cross-sublane broadcast on the serial h->h chain.
    w_i = whh_ref[0]
    w_f = whh_ref[1]
    w_g = whh_ref[2]
    w_o = whh_ref[3]

    # Static leading-dim gate-plane views (zero runtime cost).
    zi_ref = z_ref.at[0]
    zf_ref = z_ref.at[1]
    zg_ref = z_ref.at[2]
    zo_ref = z_ref.at[3]

    needs_mask = (t_total % t_chunk) != 0      # static; only last chunk ragged
    t_base = t_blk * t_chunk

    def step(t, carry):
        h, c = carry                           # (1, 128) each, pure vregs
        # All per-step work is (1,128) VPU/EUP ops; the four activations are
        # issued back-to-back so they pipeline in the EUP.
        i_g = jax.nn.sigmoid(zi_ref[pl.ds(t, 1), :] + w_i * h)
        f_g = jax.nn.sigmoid(zf_ref[pl.ds(t, 1), :] + w_f * h)
        o_g = jax.nn.sigmoid(zo_ref[pl.ds(t, 1), :] + w_o * h)
        g_g = jnp.tanh(zg_ref[pl.ds(t, 1), :] + w_g * h)
        c_new = f_g * c + i_g * g_g
        h_new = o_g * jnp.tanh(c_new)
        if needs_mask:                         # compiled in only when ragged
            valid = ((t_base + t) < t_total).astype(jnp.float32)  # scalar 0/1
            h_new = valid * h_new + (1.0 - valid) * h
            c_new = valid * c_new + (1.0 - valid) * c
        return h_new, c_new

    h_fin, c_fin = lax.fori_loop(0, t_chunk, step, (h_scr[...], c_scr[...]),
                                 unroll=min(8, t_chunk))
    h_scr[...] = h_fin
    c_scr[...] = c_fin
    # Output block index only depends on the batch axis, so the block stays
    # resident across time chunks; the write of the final chunk wins.
    h_out_ref[...] = h_fin


# ------------------------------ wrapper --------------------------------------
@jax.jit
def single_instrument_predictor_rnn_forward(x, params):
    """Full forward: returns hidden[0].squeeze(1) exactly like the torch module."""
    w_ih, w_hh, b_ih, b_hh = params
    B, T, I = x.shape
    assert I == INPUT_SIZE

    x = x.astype(jnp.float32)
    w_ih = w_ih.astype(jnp.float32)
    w_hh = w_hh.astype(jnp.float32)
    b_ih = b_ih.astype(jnp.float32)
    b_hh = b_hh.astype(jnp.float32)

    # Input projection hoisted out of the recurrence: one tiny einsum on the
    # UNPADDED input, biases folded in.  Gate-major result z[g, t, b].
    z = jnp.einsum("bti,gi->gtb", x, w_ih) + (b_ih + b_hh)[:, None, None]

    # Tiling: time chunks (multiple of 8 sublanes) and 128-lane batch tiles.
    t_chunk = min(T_CHUNK_MAX, 8 * ((T + 7) // 8))
    grid_t = -(-T // t_chunk)
    t_pad = grid_t * t_chunk
    grid_b = -(-B // LANES)
    b_pad = grid_b * LANES

    # Single fused pad into the lane/sublane-aligned slab.
    z_pad = jnp.pad(z, ((0, 0), (0, t_pad - T), (0, b_pad - B)))

    # 4 recurrent scalars (W_hh is (4, 1)); whole forward is one jit so this
    # parameter-derived constant is fused into the same XLA program.
    whh = w_hh[:, 0]

    kernel = functools.partial(_lstm_kernel, t_total=T)
    h_pad = pl.pallas_call(
        kernel,
        out_shape=jax.ShapeDtypeStruct((1, b_pad), jnp.float32),
        grid=(grid_b, grid_t),
        in_specs=[
            pl.BlockSpec((N_GATES, t_chunk, LANES), lambda b, t: (0, t, b)),
            pl.BlockSpec(memory_space=pltpu.MemorySpace.SMEM),
        ],
        out_specs=pl.BlockSpec((1, LANES), lambda b, t: (0, b)),
        scratch_shapes=[
            pltpu.VMEM((1, LANES), jnp.float32),   # h carried across T chunks
            pltpu.VMEM((1, LANES), jnp.float32),   # c carried across T chunks
        ],
        compiler_params=pltpu.CompilerParams(
            dimension_semantics=("parallel", "arbitrary")),
    )(z_pad, whh)

    h_n = h_pad[0, :B][:, None]                      # (B, H=1) final hidden
    out = h_n[None, :, :]                            # (1, B, H) == hidden[0]
    if B == 1:
        out = jnp.squeeze(out, axis=1)               # torch .squeeze(1)
    return out


def init_lstm_params(key):
    """Deterministic init matching PyTorch nn.LSTM: U(-1/sqrt(H), 1/sqrt(H))."""
    k = 1.0 / jnp.sqrt(jnp.asarray(HIDDEN_SIZE, jnp.float32))
    k1, k2, k3, k4 = jax.random.split(key, 4)
    w_ih = jax.random.uniform(k1, (4 * HIDDEN_SIZE, INPUT_SIZE), jnp.float32, -k, k)
    w_hh = jax.random.uniform(k2, (4 * HIDDEN_SIZE, HIDDEN_SIZE), jnp.float32, -k, k)
    b_ih = jax.random.uniform(k3, (4 * HIDDEN_SIZE,), jnp.float32, -k, k)
    b_hh = jax.random.uniform(k4, (4 * HIDDEN_SIZE,), jnp.float32, -k, k)
    return w_ih, w_hh, b_ih, b_hh


# --------------------------- pure-JAX reference ------------------------------
def lstm_reference(x, params):
    w_ih, w_hh, b_ih, b_hh = params
    B, T, _ = x.shape
    h = jnp.zeros((B, HIDDEN_SIZE), jnp.float32)
    c = jnp.zeros((B, HIDDEN_SIZE), jnp.float32)
    for t in range(T):
        gates = x[:, t, :] @ w_ih.T + h @ w_hh.T + b_ih + b_hh
        i, f, g, o = jnp.split(gates, 4, axis=-1)
        c = jax.nn.sigmoid(f) * c + jax.nn.sigmoid(i) * jnp.tanh(g)
        h = jax.nn.sigmoid(o) * jnp.tanh(c)
    out = h[None, :, :]
    if B == 1:
        out = jnp.squeeze(out, axis=1)
    return out


# --------------------------------- main ---------------------------------------
if __name__ == "__main__":
    key = jax.random.PRNGKey(0)
    k_x, k_p, k_x2 = jax.random.split(key, 3)
    params = init_lstm_params(k_p)

    # Primary case: batch=2, sequence_size=8 (matches the module spec).
    B, T = 2, 8
    x = jax.random.normal(k_x, (B, T, INPUT_SIZE), jnp.float32)
    out = jax.block_until_ready(single_instrument_predictor_rnn_forward(x, params))
    ref = lstm_reference(x, params)
    assert out.shape == (NUM_LAYERS, B, HIDDEN_SIZE), out.shape
    assert jnp.allclose(out, ref, atol=1e-5, rtol=1e-5), (out, ref)

    # Secondary case: ragged T (exercises the masked tail of the time chunk).
    B2, T2 = 3, 13
    x2 = jax.random.normal(k_x2, (B2, T2, INPUT_SIZE), jnp.float32)
    out2 = jax.block_until_ready(single_instrument_predictor_rnn_forward(x2, params))
    ref2 = lstm_reference(x2, params)
    assert out2.shape == (NUM_LAYERS, B2, HIDDEN_SIZE), out2.shape
    assert jnp.allclose(out2, ref2, atol=1e-5, rtol=1e-5), (out2, ref2)

    print("KERNEL_OK")
</pallas_src>

<mosaic_0001>
module attributes {stable_mosaic.version = 11 : i64} {
  func.func @_lstm_kernel(%arg0: i32, %arg1: i32, %arg2: memref<4x8x128xf32, #tpu.memory_space<vmem>>, %arg3: memref<4xf32, #tpu.memory_space<smem>>, %arg4: memref<1x128xf32, #tpu.memory_space<vmem>>, %arg5: memref<1x128xf32, #tpu.memory_space<vmem>>, %arg6: memref<1x128xf32, #tpu.memory_space<vmem>>) attributes {dimension_semantics = [#tpu.dimension_semantics<parallel>, #tpu.dimension_semantics<arbitrary>], iteration_bounds = array<i64: 1, 1>, scalar_prefetch = 0 : i64, scratch_operands = 2 : i64, tpu.core_type = #tpu.core_type<tc>, window_params = [{transform_indices = @transform_0, window_bounds = array<i64: 4, 8, 128>}, {transform_indices = @transform_1, window_bounds = array<i64: 4>}, {transform_indices = @transform_2, window_bounds = array<i64: 1, 128>}]} {
    %c0_i32 = arith.constant 0 : i32
    %0 = arith.cmpi eq, %arg1, %c0_i32 : i32
    %1 = arith.extui %0 : i1 to i32
    %c0_i32_0 = arith.constant 0 : i32
    %2 = arith.cmpi ne, %1, %c0_i32_0 : i32
    scf.if %2 {
      %cst_135 = arith.constant 0.000000e+00 : f32
      %404 = vector.broadcast %cst_135 : f32 to vector<1x128xf32>
      %c0_136 = arith.constant 0 : index
      %c0_137 = arith.constant 0 : index
      %405 = vector.load %arg5[%c0_136, %c0_137] : memref<1x128xf32, #tpu.memory_space<vmem>>, vector<1x128xf32>
      tpu.vector_store %arg5[%c0_136, %c0_137], %404 {strides = array<i32>} : memref<1x128xf32, #tpu.memory_space<vmem>>, vector<1x128xf32>,
      %cst_138 = arith.constant 0.000000e+00 : f32
      %406 = vector.broadcast %cst_138 : f32 to vector<1x128xf32>
      %c0_139 = arith.constant 0 : index
      %c0_140 = arith.constant 0 : index
      %407 = vector.load %arg6[%c0_139, %c0_140] : memref<1x128xf32, #tpu.memory_space<vmem>>, vector<1x128xf32>
      tpu.vector_store %arg6[%c0_139, %c0_140], %406 {strides = array<i32>} : memref<1x128xf32, #tpu.memory_space<vmem>>, vector<1x128xf32>,
    } else {
    }
    %c0 = arith.constant 0 : index
    %3 = memref.load %arg3[%c0] : memref<4xf32, #tpu.memory_space<smem>>
    %c1 = arith.constant 1 : index
    %4 = memref.load %arg3[%c1] : memref<4xf32, #tpu.memory_space<smem>>
    %c2 = arith.constant 2 : index
    %5 = memref.load %arg3[%c2] : memref<4xf32, #tpu.memory_space<smem>>
    %c3 = arith.constant 3 : index
    %6 = memref.load %arg3[%c3] : memref<4xf32, #tpu.memory_space<smem>>
    %c0_1 = arith.constant 0 : index
    %c0_2 = arith.constant 0 : index
    %7 = vector.load %arg5[%c0_1, %c0_2] : memref<1x128xf32, #tpu.memory_space<vmem>>, vector<1x128xf32>
    %c0_3 = arith.constant 0 : index
    %c0_4 = arith.constant 0 : index
    %8 = vector.load %arg6[%c0_3, %c0_4] : memref<1x128xf32, #tpu.memory_space<vmem>>, vector<1x128xf32>
    %c0_i32_5 = arith.constant 0 : i32
    %c1_i32 = arith.constant 1 : i32
    %c3_i32 = arith.constant 3 : i32
    %c2_i32 = arith.constant 2 : i32
    %c0_i32_6 = arith.constant 0 : i32
    %c0_i32_7 = arith.constant 0 : i32
    %c0_i32_8 = arith.constant 0 : i32
    %9 = tpu.memref_slice %arg2[%c0_i32_5, %c0_i32_7, %c0_i32_8] : memref<4x8x128xf32, #tpu.memory_space<vmem>> -> memref<1x8x128xf32, #tpu.memory_space<vmem>>
    %10 = tpu.memref_squeeze %9 : memref<1x8x128xf32, #tpu.memory_space<vmem>> -> memref<8x128xf32, #tpu.memory_space<vmem>>
    %11 = arith.index_cast %c0_i32_6 : i32 to index
    %c0_9 = arith.constant 0 : index
    %12 = vector.load %10[%11, %c0_9] : memref<8x128xf32, #tpu.memory_space<vmem>>, vector<1x128xf32>
    %13 = vector.broadcast %3 : f32 to vector<1x128xf32>
    %14 = arith.mulf %13, %7 : vector<1x128xf32>
    %15 = arith.addf %12, %14 : vector<1x128xf32>
    %16 = arith.negf %15 : vector<1x128xf32>
    %17 = math.exp %16 : vector<1x128xf32>
    %cst = arith.constant 1.000000e+00 : f32
    %18 = vector.broadcast %cst : f32 to vector<1x128xf32>
    %19 = arith.addf %18, %17 : vector<1x128xf32>
    %20 = arith.divf %18, %19 : vector<1x128xf32>
    %c0_i32_10 = arith.constant 0 : i32
    %c0_i32_11 = arith.constant 0 : i32
    %21 = tpu.memref_slice %arg2[%c1_i32, %c0_i32_10, %c0_i32_11] : memref<4x8x128xf32, #tpu.memory_space<vmem>> -> memref<1x8x128xf32, #tpu.memory_space<vmem>>
    %22 = tpu.memref_squeeze %21 : memref<1x8x128xf32, #tpu.memory_space<vmem>> -> memref<8x128xf32, #tpu.memory_space<vmem>>
    %23 = arith.index_cast %c0_i32_6 : i32 to index
    %c0_12 = arith.constant 0 : index
    %24 = vector.load %22[%23, %c0_12] : memref<8x128xf32, #tpu.memory_space<vmem>>, vector<1x128xf32>
    %25 = vector.broadcast %4 : f32 to vector<1x128xf32>
    %26 = arith.mulf %25, %7 : vector<1x128xf32>
    %27 = arith.addf %24, %26 : vector<1x128xf32>
    %28 = arith.negf %27 : vector<1x128xf32>
    %29 = math.exp %28 : vector<1x128xf32>
    %cst_13 = arith.constant 1.000000e+00 : f32
    %30 = vector.broadcast %cst_13 : f32 to vector<1x128xf32>
    %31 = arith.addf %30, %29 : vector<1x128xf32>
    %32 = arith.divf %30, %31 : vector<1x128xf32>
    %c0_i32_14 = arith.constant 0 : i32
    %c0_i32_15 = arith.constant 0 : i32
    %33 = tpu.memref_slice %arg2[%c3_i32, %c0_i32_14, %c0_i32_15] : memref<4x8x128xf32, #tpu.memory_space<vmem>> -> memref<1x8x128xf32, #tpu.memory_space<vmem>>
    %34 = tpu.memref_squeeze %33 : memref<1x8x128xf32, #tpu.memory_space<vmem>> -> memref<8x128xf32, #tpu.memory_space<vmem>>
    %35 = arith.index_cast %c0_i32_6 : i32 to index
    %c0_16 = arith.constant 0 : index
    %36 = vector.load %34[%35, %c0_16] : memref<8x128xf32, #tpu.memory_space<vmem>>, vector<1x128xf32>
    %37 = vector.broadcast %6 : f32 to vector<1x128xf32>
    %38 = arith.mulf %37, %7 : vector<1x128xf32>
    %39 = arith.addf %36, %38 : vector<1x128xf32>
    %40 = arith.negf %39 : vector<1x128xf32>
    %41 = math.exp %40 : vector<1x128xf32>
    %cst_17 = arith.constant 1.000000e+00 : f32
    %42 = vector.broadcast %cst_17 : f32 to vector<1x128xf32>
    %43 = arith.addf %42, %41 : vector<1x128xf32>
    %44 = arith.divf %42, %43 : vector<1x128xf32>
    %c0_i32_18 = arith.constant 0 : i32
    %c0_i32_19 = arith.constant 0 : i32
    %45 = tpu.memref_slice %arg2[%c2_i32, %c0_i32_18, %c0_i32_19] : memref<4x8x128xf32, #tpu.memory_space<vmem>> -> memref<1x8x128xf32, #tpu.memory_space<vmem>>
    %46 = tpu.memref_squeeze %45 : memref<1x8x128xf32, #tpu.memory_space<vmem>> -> memref<8x128xf32, #tpu.memory_space<vmem>>
    %47 = arith.index_cast %c0_i32_6 : i32 to index
    %c0_20 = arith.constant 0 : index
    %48 = vector.load %46[%47, %c0_20] : memref<8x128xf32, #tpu.memory_space<vmem>>, vector<1x128xf32>
    %49 = vector.broadcast %5 : f32 to vector<1x128xf32>
    %50 = arith.mulf %49, %7 : vector<1x128xf32>
    %51 = arith.addf %48, %50 : vector<1x128xf32>
    %52 = math.tanh %51 : vector<1x128xf32>
    %53 = arith.mulf %32, %8 : vector<1x128xf32>
    %54 = arith.mulf %20, %52 : vector<1x128xf32>
    %55 = arith.addf %53, %54 : vector<1x128xf32>
    %56 = math.tanh %55 : vector<1x128xf32>
    %57 = arith.mulf %44, %56 : vector<1x128xf32>
    %c1_i32_21 = arith.constant 1 : i32
    %c0_i32_22 = arith.constant 0 : i32
    %c0_i32_23 = arith.constant 0 : i32
    %58 = tpu.memref_slice %arg2[%c0_i32_5, %c0_i32_22, %c0_i32_23] : memref<4x8x128xf32, #tpu.memory_space<vmem>> -> memref<1x8x128xf32, #tpu.memory_space<vmem>>
    %59 = tpu.memref_squeeze %58 : memref<1x8x128xf32, #tpu.memory_space<vmem>> -> memref<8x128xf32, #tpu.memory_space<vmem>>
    %60 = arith.index_cast %c1_i32_21 : i32 to index
    %c0_24 = arith.constant 0 : index
    %61 = vector.load %59[%60, %c0_24] : memref<8x128xf32, #tpu.memory_space<vmem>>, vector<1x128xf32>
    %62 = vector.broadcast %3 : f32 to vector<1x128xf32>
    %63 = arith.mulf %62, %57 : vector<1x128xf32>
    %64 = arith.addf %61, %63 : vector<1x128xf32>
    %65 = arith.negf %64 : vector<1x128xf32>
    %66 = math.exp %65 : vector<1x128xf32>
    %cst_25 = arith.constant 1.000000e+00 : f32
    %67 = vector.broadcast %cst_25 : f32 to vector<1x128xf32>
    %68 = arith.addf %67, %66 : vector<1x128xf32>
    %69 = arith.divf %67, %68 : vector<1x128xf32>
    %c0_i32_26 = arith.constant 0 : i32
    %c0_i32_27 = arith.constant 0 : i32
    %70 = tpu.memref_slice %arg2[%c1_i32, %c0_i32_26, %c0_i32_27] : memref<4x8x128xf32, #tpu.memory_space<vmem>> -> memref<1x8x128xf32, #tpu.memory_space<vmem>>
    %71 = tpu.memref_squeeze %70 : memref<1x8x128xf32, #tpu.memory_space<vmem>> -> memref<8x128xf32, #tpu.memory_space<vmem>>
    %72 = arith.index_cast %c1_i32_21 : i32 to index
    %c0_28 = arith.constant 0 : index
    %73 = vector.load %71[%72, %c0_28] : memref<8x128xf32, #tpu.memory_space<vmem>>, vector<1x128xf32>
    %74 = vector.broadcast %4 : f32 to vector<1x128xf32>
    %75 = arith.mulf %74, %57 : vector<1x128xf32>
    %76 = arith.addf %73, %75 : vector<1x128xf32>
    %77 = arith.negf %76 : vector<1x128xf32>
    %78 = math.exp %77 : vector<1x128xf32>
    %cst_29 = arith.constant 1.000000e+00 : f32
    %79 = vector.broadcast %cst_29 : f32 to vector<1x128xf32>
    %80 = arith.addf %79, %78 : vector<1x128xf32>
    %81 = arith.divf %79, %80 : vector<1x128xf32>
    %c0_i32_30 = arith.constant 0 : i32
    %c0_i32_31 = arith.constant 0 : i32
    %82 = tpu.memref_slice %arg2[%c3_i32, %c0_i32_30, %c0_i32_31] : memref<4x8x128xf32, #tpu.memory_space<vmem>> -> memref<1x8x128xf32, #tpu.memory_space<vmem>>
    %83 = tpu.memref_squeeze %82 : memref<1x8x128xf32, #tpu.memory_space<vmem>> -> memref<8x128xf32, #tpu.memory_space<vmem>>
    %84 = arith.index_cast %c1_i32_21 : i32 to index
    %c0_32 = arith.constant 0 : index
    %85 = vector.load %83[%84, %c0_32] : memref<8x128xf32, #tpu.memory_space<vmem>>, vector<1x128xf32>
    %86 = vector.broadcast %6 : f32 to vector<1x128xf32>
    %87 = arith.mulf %86, %57 : vector<1x128xf32>
    %88 = arith.addf %85, %87 : vector<1x128xf32>
    %89 = arith.negf %88 : vector<1x128xf32>
    %90 = math.exp %89 : vector<1x128xf32>
    %cst_33 = arith.constant 1.000000e+00 : f32
    %91 = vector.broadcast %cst_33 : f32 to vector<1x128xf32>
    %92 = arith.addf %91, %90 : vector<1x128xf32>
    %93 = arith.divf %91, %92 : vector<1x128xf32>
    %c0_i32_34 = arith.constant 0 : i32
    %c0_i32_35 = arith.constant 0 : i32
    %94 = tpu.memref_slice %arg2[%c2_i32, %c0_i32_34, %c0_i32_35] : memref<4x8x128xf32, #tpu.memory_space<vmem>> -> memref<1x8x128xf32, #tpu.memory_space<vmem>>
    %95 = tpu.memref_squeeze %94 : memref<1x8x128xf32, #tpu.memory_space<vmem>> -> memref<8x128xf32, #tpu.memory_space<vmem>>
    %96 = arith.index_cast %c1_i32_21 : i32 to index
    %c0_36 = arith.constant 0 : index
    %97 = vector.load %95[%96, %c0_36] : memref<8x128xf32, #tpu.memory_space<vmem>>, vector<1x128xf32>
    %98 = vector.broadcast %5 : f32 to vector<1x128xf32>
    %99 = arith.mulf %98, %57 : vector<1x128xf32>
    %100 = arith.addf %97, %99 : vector<1x128xf32>
    %101 = math.tanh %100 : vector<1x128xf32>
    %102 = arith.mulf %81, %55 : vector<1x128xf32>
    %103 = arith.mulf %69, %101 : vector<1x128xf32>
    %104 = arith.addf %102, %103 : vector<1x128xf32>
    %105 = math.tanh %104 : vector<1x128xf32>
    %106 = arith.mulf %93, %105 : vector<1x128xf32>
    %c2_i32_37 = arith.constant 2 : i32
    %c0_i32_38 = arith.constant 0 : i32
    %c0_i32_39 = arith.constant 0 : i32
    %107 = tpu.memref_slice %arg2[%c0_i32_5, %c0_i32_38, %c0_i32_39] : memref<4x8x128xf32, #tpu.memory_space<vmem>> -> memref<1x8x128xf32, #tpu.memory_space<vmem>>
    %108 = tpu.memref_squeeze %107 : memref<1x8x128xf32, #tpu.memory_space<vmem>> -> memref<8x128xf32, #tpu.memory_space<vmem>>
    %109 = arith.index_cast %c2_i32_37 : i32 to index
    %c0_40 = arith.constant 0 : index
    %110 = vector.load %108[%109, %c0_40] : memref<8x128xf32, #tpu.memory_space<vmem>>, vector<1x128xf32>
    %111 = vector.broadcast %3 : f32 to vector<1x128xf32>
    %112 = arith.mulf %111, %106 : vector<1x128xf32>
    %113 = arith.addf %110, %112 : vector<1x128xf32>
    %114 = arith.negf %113 : vector<1x128xf32>
    %115 = math.exp %114 : vector<1x128xf32>
    %cst_41 = arith.constant 1.000000e+00 : f32
    %116 = vector.broadcast %cst_41 : f32 to vector<1x128xf32>
    %117 = arith.addf %116, %115 : vector<1x128xf32>
    %118 = arith.divf %116, %117 : vector<1x128xf32>
    %c0_i32_42 = arith.constant 0 : i32
    %c0_i32_43 = arith.constant 0 : i32
    %119 = tpu.memref_slice %arg2[%c1_i32, %c0_i32_42, %c0_i32_43] : memref<4x8x128xf32, #tpu.memory_space<vmem>> -> memref<1x8x128xf32, #tpu.memory_space<vmem>>
    %120 = tpu.memref_squeeze %119 : memref<1x8x128xf32, #tpu.memory_space<vmem>> -> memref<8x128xf32, #tpu.memory_space<vmem>>
    %121 = arith.index_cast %c2_i32_37 : i32 to index
    %c0_44 = arith.constant 0 : index
    %122 = vector.load %120[%121, %c0_44] : memref<8x128xf32, #tpu.memory_space<vmem>>, vector<1x128xf32>
    %123 = vector.broadcast %4 : f32 to vector<1x128xf32>
    %124 = arith.mulf %123, %106 : vector<1x128xf32>
    %125 = arith.addf %122, %124 : vector<1x128xf32>
    %126 = arith.negf %125 : vector<1x128xf32>
    %127 = math.exp %126 : vector<1x128xf32>
    %cst_45 = arith.constant 1.000000e+00 : f32
    %128 = vector.broadcast %cst_45 : f32 to vector<1x128xf32>
    %129 = arith.addf %128, %127 : vector<1x128xf32>
    %130 = arith.divf %128, %129 : vector<1x128xf32>
    %c0_i32_46 = arith.constant 0 : i32
    %c0_i32_47 = arith.constant 0 : i32
    %131 = tpu.memref_slice %arg2[%c3_i32, %c0_i32_46, %c0_i32_47] : memref<4x8x128xf32, #tpu.memory_space<vmem>> -> memref<1x8x128xf32, #tpu.memory_space<vmem>>
    %132 = tpu.memref_squeeze %131 : memref<1x8x128xf32, #tpu.memory_space<vmem>> -> memref<8x128xf32, #tpu.memory_space<vmem>>
    %133 = arith.index_cast %c2_i32_37 : i32 to index
    %c0_48 = arith.constant 0 : index
    %134 = vector.load %132[%133, %c0_48] : memref<8x128xf32, #tpu.memory_space<vmem>>, vector<1x128xf32>
    %135 = vector.broadcast %6 : f32 to vector<1x128xf32>
    %136 = arith.mulf %135, %106 : vector<1x128xf32>
    %137 = arith.addf %134, %136 : vector<1x128xf32>
    %138 = arith.negf %137 : vector<1x128xf32>
    %139 = math.exp %138 : vector<1x128xf32>
    %cst_49 = arith.constant 1.000000e+00 : f32
    %140 = vector.broadcast %cst_49 : f32 to vector<1x128xf32>
    %141 = arith.addf %140, %139 : vector<1x128xf32>
    %142 = arith.divf %140, %141 : vector<1x128xf32>
    %c0_i32_50 = arith.constant 0 : i32
    %c0_i32_51 = arith.constant 0 : i32
    %143 = tpu.memref_slice %arg2[%c2_i32, %c0_i32_50, %c0_i32_51] : memref<4x8x128xf32, #tpu.memory_space<vmem>> -> memref<1x8x128xf32, #tpu.memory_space<vmem>>
    %144 = tpu.memref_squeeze %143 : memref<1x8x128xf32, #tpu.memory_space<vmem>> -> memref<8x128xf32, #tpu.memory_space<vmem>>
    %145 = arith.index_cast %c2_i32_37 : i32 to index
    %c0_52 = arith.constant 0 : index
    %146 = vector.load %144[%145, %c0_52] : memref<8x128xf32, #tpu.memory_space<vmem>>, vector<1x128xf32>
    %147 = vector.broadcast %5 : f32 to vector<1x128xf32>
    %148 = arith.mulf %147, %106 : vector<1x128xf32>
    %149 = arith.addf %146, %148 : vector<1x128xf32>
    %150 = math.tanh %149 : vector<1x128xf32>
    %151 = arith.mulf %130, %104 : vector<1x128xf32>
    %152 = arith.mulf %118, %150 : vector<1x128xf32>
    %153 = arith.addf %151, %152 : vector<1x128xf32>
    %154 = math.tanh %153 : vector<1x128xf32>
    %155 = arith.mulf %142, %154 : vector<1x128xf32>
    %c3_i32_53 = arith.constant 3 : i32
    %c0_i32_54 = arith.constant 0 : i32
    %c0_i32_55 = arith.constant 0 : i32
    %156 = tpu.memref_slice %arg2[%c0_i32_5, %c0_i32_54, %c0_i32_55] : memref<4x8x128xf32, #tpu.memory_space<vmem>> -> memref<1x8x128xf32, #tpu.memory_space<vmem>>
    %157 = tpu.memref_squeeze %156 : memref<1x8x128xf32, #tpu.memory_space<vmem>> -> memref<8x128xf32, #tpu.memory_space<vmem>>
    %158 = arith.index_cast %c3_i32_53 : i32 to index
    %c0_56 = arith.constant 0 : index
    %159 = vector.load %157[%158, %c0_56] : memref<8x128xf32, #tpu.memory_space<vmem>>, vector<1x128xf32>
    %160 = vector.broadcast %3 : f32 to vector<1x128xf32>
    %161 = arith.mulf %160, %155 : vector<1x128xf32>
    %162 = arith.addf %159, %161 : vector<1x128xf32>
    %163 = arith.negf %162 : vector<1x128xf32>
    %164 = math.exp %163 : vector<1x128xf32>
    %cst_57 = arith.constant 1.000000e+00 : f32
    %165 = vector.broadcast %cst_57 : f32 to vector<1x128xf32>
    %166 = arith.addf %165, %164 : vector<1x128xf32>
    %167 = arith.divf %165, %166 : vector<1x128xf32>
    %c0_i32_58 = arith.constant 0 : i32
    %c0_i32_59 = arith.constant 0 : i32
    %168 = tpu.memref_slice %arg2[%c1_i32, %c0_i32_58, %c0_i32_59] : memref<4x8x128xf32, #tpu.memory_space<vmem>> -> memref<1x8x128xf32, #tpu.memory_space<vmem>>
    %169 = tpu.memref_squeeze %168 : memref<1x8x128xf32, #tpu.memory_space<vmem>> -> memref<8x128xf32, #tpu.memory_space<vmem>>
    %170 = arith.index_cast %c3_i32_53 : i32 to index
    %c0_60 = arith.constant 0 : index
    %171 = vector.load %169[%170, %c0_60] : memref<8x128xf32, #tpu.memory_space<vmem>>, vector<1x128xf32>
    %172 = vector.broadcast %4 : f32 to vector<1x128xf32>
    %173 = arith.mulf %172, %155 : vector<1x128xf32>
    %174 = arith.addf %171, %173 : vector<1x128xf32>
    %175 = arith.negf %174 : vector<1x128xf32>
    %176 = math.exp %175 : vector<1x128xf32>
    %cst_61 = arith.constant 1.000000e+00 : f32
    %177 = vector.broadcast %cst_61 : f32 to vector<1x128xf32>
    %178 = arith.addf %177, %176 : vector<1x128xf32>
    %179 = arith.divf %177, %178 : vector<1x128xf32>
    %c0_i32_62 = arith.constant 0 : i32
    %c0_i32_63 = arith.constant 0 : i32
    %180 = tpu.memref_slice %arg2[%c3_i32, %c0_i32_62, %c0_i32_63] : memref<4x8x128xf32, #tpu.memory_space<vmem>> -> memref<1x8x128xf32, #tpu.memory_space<vmem>>
    %181 = tpu.memref_squeeze %180 : memref<1x8x128xf32, #tpu.memory_space<vmem>> -> memref<8x128xf32, #tpu.memory_space<vmem>>
    %182 = arith.index_cast %c3_i32_53 : i32 to index
    %c0_64 = arith.constant 0 : index
    %183 = vector.load %181[%182, %c0_64] : memref<8x128xf32, #tpu.memory_space<vmem>>, vector<1x128xf32>
    %184 = vector.broadcast %6 : f32 to vector<1x128xf32>
    %185 = arith.mulf %184, %155 : vector<1x128xf32>
    %186 = arith.addf %183, %185 : vector<1x128xf32>
    %187 = arith.negf %186 : vector<1x128xf32>
    %188 = math.exp %187 : vector<1x128xf32>
    %cst_65 = arith.constant 1.000000e+00 : f32
    %189 = vector.broadcast %cst_65 : f32 to vector<1x128xf32>
    %190 = arith.addf %189, %188 : vector<1x128xf32>
    %191 = arith.divf %189, %190 : vector<1x128xf32>
    %c0_i32_66 = arith.constant 0 : i32
    %c0_i32_67 = arith.constant 0 : i32
    %192 = tpu.memref_slice %arg2[%c2_i32, %c0_i32_66, %c0_i32_67] : memref<4x8x128xf32, #tpu.memory_space<vmem>> -> memref<1x8x128xf32, #tpu.memory_space<vmem>>
    %193 = tpu.memref_squeeze %192 : memref<1x8x128xf32, #tpu.memory_space<vmem>> -> memref<8x128xf32, #tpu.memory_space<vmem>>
    %194 = arith.index_cast %c3_i32_53 : i32 to index
    %c0_68 = arith.constant 0 : index
    %195 = vector.load %193[%194, %c0_68] : memref<8x128xf32, #tpu.memory_space<vmem>>, vector<1x128xf32>
    %196 = vector.broadcast %5 : f32 to vector<1x128xf32>
    %197 = arith.mulf %196, %155 : vector<1x128xf32>
    %198 = arith.addf %195, %197 : vector<1x128xf32>
    %199 = math.tanh %198 : vector<1x128xf32>
    %200 = arith.mulf %179, %153 : vector<1x128xf32>
    %201 = arith.mulf %167, %199 : vector<1x128xf32>
    %202 = arith.addf %200, %201 : vector<1x128xf32>
    %203 = math.tanh %202 : vector<1x128xf32>
    %204 = arith.mulf %191, %203 : vector<1x128xf32>
    %c4_i32 = arith.constant 4 : i32
    %c0_i32_69 = arith.constant 0 : i32
    %c0_i32_70 = arith.constant 0 : i32
    %205 = tpu.memref_slice %arg2[%c0_i32_5, %c0_i32_69, %c0_i32_70] : memref<4x8x128xf32, #tpu.memory_space<vmem>> -> memref<1x8x128xf32, #tpu.memory_space<vmem>>
    %206 = tpu.memref_squeeze %205 : memref<1x8x128xf32, #tpu.memory_space<vmem>> -> memref<8x128xf32, #tpu.memory_space<vmem>>
    %207 = arith.index_cast %c4_i32 : i32 to index
    %c0_71 = arith.constant 0 : index
    %208 = vector.load %206[%207, %c0_71] : memref<8x128xf32, #tpu.memory_space<vmem>>, vector<1x128xf32>
    %209 = vector.broadcast %3 : f32 to vector<1x128xf32>
    %210 = arith.mulf %209, %204 : vector<1x128xf32>
    %211 = arith.addf %208, %210 : vector<1x128xf32>
    %212 = arith.negf %211 : vector<1x128xf32>
    %213 = math.exp %212 : vector<1x128xf32>
    %cst_72 = arith.constant 1.000000e+00 : f32
    %214 = vector.broadcast %cst_72 : f32 to vector<1x128xf32>
    %215 = arith.addf %214, %213 : vector<1x128xf32>
    %216 = arith.divf %214, %215 : vector<1x128xf32>
    %c0_i32_73 = arith.constant 0 : i32
    %c0_i32_74 = arith.constant 0 : i32
    %217 = tpu.memref_slice %arg2[%c1_i32, %c0_i32_73, %c0_i32_74] : memref<4x8x128xf32, #tpu.memory_space<vmem>> -> memref<1x8x128xf32, #tpu.memory_space<vmem>>
    %218 = tpu.memref_squeeze %217 : memref<1x8x128xf32, #tpu.memory_space<vmem>> -> memref<8x128xf32, #tpu.memory_space<vmem>>
    %219 = arith.index_cast %c4_i32 : i32 to index
    %c0_75 = arith.constant 0 : index
    %220 = vector.load %218[%219, %c0_75] : memref<8x128xf32, #tpu.memory_space<vmem>>, vector<1x128xf32>
    %221 = vector.broadcast %4 : f32 to vector<1x128xf32>
    %222 = arith.mulf %221, %204 : vector<1x128xf32>
    %223 = arith.addf %220, %222 : vector<1x128xf32>
    %224 = arith.negf %223 : vector<1x128xf32>
    %225 = math.exp %224 : vector<1x128xf32>
    %cst_76 = arith.constant 1.000000e+00 : f32
    %226 = vector.broadcast %cst_76 : f32 to vector<1x128xf32>
    %227 = arith.addf %226, %225 : vector<1x128xf32>
    %228 = arith.divf %226, %227 : vector<1x128xf32>
    %c0_i32_77 = arith.constant 0 : i32
    %c0_i32_78 = arith.constant 0 : i32
    %229 = tpu.memref_slice %arg2[%c3_i32, %c0_i32_77, %c0_i32_78] : memref<4x8x128xf32, #tpu.memory_space<vmem>> -> memref<1x8x128xf32, #tpu.memory_space<vmem>>
    %230 = tpu.memref_squeeze %229 : memref<1x8x128xf32, #tpu.memory_space<vmem>> -> memref<8x128xf32, #tpu.memory_space<vmem>>
    %231 = arith.index_cast %c4_i32 : i32 to index
    %c0_79 = arith.constant 0 : index
    %232 = vector.load %230[%231, %c0_79] : memref<8x128xf32, #tpu.memory_space<vmem>>, vector<1x128xf32>
    %233 = vector.broadcast %6 : f32 to vector<1x128xf32>
    %234 = arith.mulf %233, %204 : vector<1x128xf32>
    %235 = arith.addf %232, %234 : vector<1x128xf32>
    %236 = arith.negf %235 : vector<1x128xf32>
    %237 = math.exp %236 : vector<1x128xf32>
    %cst_80 = arith.constant 1.000000e+00 : f32
    %238 = vector.broadcast %cst_80 : f32 to vector<1x128xf32>
    %239 = arith.addf %238, %237 : vector<1x128xf32>
    %240 = arith.divf %238, %239 : vector<1x128xf32>
    %c0_i32_81 = arith.constant 0 : i32
    %c0_i32_82 = arith.constant 0 : i32
    %241 = tpu.memref_slice %arg2[%c2_i32, %c0_i32_81, %c0_i32_82] : memref<4x8x128xf32, #tpu.memory_space<vmem>> -> memref<1x8x128xf32, #tpu.memory_space<vmem>>
    %242 = tpu.memref_squeeze %241 : memref<1x8x128xf32, #tpu.memory_space<vmem>> -> memref<8x128xf32, #tpu.memory_space<vmem>>
    %243 = arith.index_cast %c4_i32 : i32 to index
    %c0_83 = arith.constant 0 : index
    %244 = vector.load %242[%243, %c0_83] : memref<8x128xf32, #tpu.memory_space<vmem>>, vector<1x128xf32>
    %245 = vector.broadcast %5 : f32 to vector<1x128xf32>
    %246 = arith.mulf %245, %204 : vector<1x128xf32>
    %247 = arith.addf %244, %246 : vector<1x128xf32>
    %248 = math.tanh %247 : vector<1x128xf32>
    %249 = arith.mulf %228, %202 : vector<1x128xf32>
    %250 = arith.mulf %216, %248 : vector<1x128xf32>
    %251 = arith.addf %249, %250 : vector<1x128xf32>
    %252 = math.tanh %251 : vector<1x128xf32>
    %253 = arith.mulf %240, %252 : vector<1x128xf32>
    %c5_i32 = arith.constant 5 : i32
    %c0_i32_84 = arith.constant 0 : i32
    %c0_i32_85 = arith.constant 0 : i32
    %254 = tpu.memref_slice %arg2[%c0_i32_5, %c0_i32_84, %c0_i32_85] : memref<4x8x128xf32, #tpu.memory_space<vmem>> -> memref<1x8x128xf32, #tpu.memory_space<vmem>>
    %255 = tpu.memref_squeeze %254 : memref<1x8x128xf32, #tpu.memory_space<vmem>> -> memref<8x128xf32, #tpu.memory_space<vmem>>
    %256 = arith.index_cast %c5_i32 : i32 to index
    %c0_86 = arith.constant 0 : index
    %257 = vector.load %255[%256, %c0_86] : memref<8x128xf32, #tpu.memory_space<vmem>>, vector<1x128xf32>
    %258 = vector.broadcast %3 : f32 to vector<1x128xf32>
    %259 = arith.mulf %258, %253 : vector<1x128xf32>
    %260 = arith.addf %257, %259 : vector<1x128xf32>
    %261 = arith.negf %260 : vector<1x128xf32>
    %262 = math.exp %261 : vector<1x128xf32>
    %cst_87 = arith.constant 1.000000e+00 : f32
    %263 = vector.broadcast %cst_87 : f32 to vector<1x128xf32>
    %264 = arith.addf %263, %262 : vector<1x128xf32>
    %265 = arith.divf %263, %264 : vector<1x128xf32>
    %c0_i32_88 = arith.constant 0 : i32
    %c0_i32_89 = arith.constant 0 : i32
    %266 = tpu.memref_slice %arg2[%c1_i32, %c0_i32_88, %c0_i32_89] : memref<4x8x128xf32, #tpu.memory_space<vmem>> -> memref<1x8x128xf32, #tpu.memory_space<vmem>>
    %267 = tpu.memref_squeeze %266 : memref<1x8x128xf32, #tpu.memory_space<vmem>> -> memref<8x128xf32, #tpu.memory_space<vmem>>
    %268 = arith.index_cast %c5_i32 : i32 to index
    %c0_90 = arith.constant 0 : index
    %269 = vector.load %267[%268, %c0_90] : memref<8x128xf32, #tpu.memory_space<vmem>>, vector<1x128xf32>
    %270 = vector.broadcast %4 : f32 to vector<1x128xf32>
    %271 = arith.mulf %270, %253 : vector<1x128xf32>
    %272 = arith.addf %269, %271 : vector<1x128xf32>
    %273 = arith.negf %272 : vector<1x128xf32>
    %274 = math.exp %273 : vector<1x128xf32>
    %cst_91 = arith.constant 1.000000e+00 : f32
    %275 = vector.broadcast %cst_91 : f32 to vector<1x128xf32>
    %276 = arith.addf %275, %274 : vector<1x128xf32>
    %277 = arith.divf %275, %276 : vector<1x128xf32>
    %c0_i32_92 = arith.constant 0 : i32
    %c0_i32_93 = arith.constant 0 : i32
    %278 = tpu.memref_slice %arg2[%c3_i32, %c0_i32_92, %c0_i32_93] : memref<4x8x128xf32, #tpu.memory_space<vmem>> -> memref<1x8x128xf32, #tpu.memory_space<vmem>>
    %279 = tpu.memref_squeeze %278 : memref<1x8x128xf32, #tpu.memory_space<vmem>> -> memref<8x128xf32, #tpu.memory_space<vmem>>
    %280 = arith.index_cast %c5_i32 : i32 to index
    %c0_94 = arith.constant 0 : index
    %281 = vector.load %279[%280, %c0_94] : memref<8x128xf32, #tpu.memory_space<vmem>>, vector<1x128xf32>
    %282 = vector.broadcast %6 : f32 to vector<1x128xf32>
    %283 = arith.mulf %282, %253 : vector<1x128xf32>
    %284 = arith.addf %281, %283 : vector<1x128xf32>
    %285 = arith.negf %284 : vector<1x128xf32>
    %286 = math.exp %285 : vector<1x128xf32>
    %cst_95 = arith.constant 1.000000e+00 : f32
    %287 = vector.broadcast %cst_95 : f32 to vector<1x128xf32>
    %288 = arith.addf %287, %286 : vector<1x128xf32>
    %289 = arith.divf %287, %288 : vector<1x128xf32>
    %c0_i32_96 = arith.constant 0 : i32
    %c0_i32_97 = arith.constant 0 : i32
    %290 = tpu.memref_slice %arg2[%c2_i32, %c0_i32_96, %c0_i32_97] : memref<4x8x128xf32, #tpu.memory_space<vmem>> -> memref<1x8x128xf32, #tpu.memory_space<vmem>>
    %291 = tpu.memref_squeeze %290 : memref<1x8x128xf32, #tpu.memory_space<vmem>> -> memref<8x128xf32, #tpu.memory_space<vmem>>
    %292 = arith.index_cast %c5_i32 : i32 to index
    %c0_98 = arith.constant 0 : index
    %293 = vector.load %291[%292, %c0_98] : memref<8x128xf32, #tpu.memory_space<vmem>>, vector<1x128xf32>
    %294 = vector.broadcast %5 : f32 to vector<1x128xf32>
    %295 = arith.mulf %294, %253 : vector<1x128xf32>
    %296 = arith.addf %293, %295 : vector<1x128xf32>
    %297 = math.tanh %296 : vector<1x128xf32>
    %298 = arith.mulf %277, %251 : vector<1x128xf32>
    %299 = arith.mulf %265, %297 : vector<1x128xf32>
    %300 = arith.addf %298, %299 : vector<1x128xf32>
    %301 = math.tanh %300 : vector<1x128xf32>
    %302 = arith.mulf %289, %301 : vector<1x128xf32>
    %c6_i32 = arith.constant 6 : i32
    %c0_i32_99 = arith.constant 0 : i32
    %c0_i32_100 = arith.constant 0 : i32
    %303 = tpu.memref_slice %arg2[%c0_i32_5, %c0_i32_99, %c0_i32_100] : memref<4x8x128xf32, #tpu.memory_space<vmem>> -> memref<1x8x128xf32, #tpu.memory_space<vmem>>
    %304 = tpu.memref_squeeze %303 : memref<1x8x128xf32, #tpu.memory_space<vmem>> -> memref<8x128xf32, #tpu.memory_space<vmem>>
    %305 = arith.index_cast %c6_i32 : i32 to index
    %c0_101 = arith.constant 0 : index
    %306 = vector.load %304[%305, %c0_101] : memref<8x128xf32, #tpu.memory_space<vmem>>, vector<1x128xf32>
    %307 = vector.broadcast %3 : f32 to vector<1x128xf32>
    %308 = arith.mulf %307, %302 : vector<1x128xf32>
    %309 = arith.addf %306, %308 : vector<1x128xf32>
    %310 = arith.negf %309 : vector<1x128xf32>
    %311 = math.exp %310 : vector<1x128xf32>
    %cst_102 = arith.constant 1.000000e+00 : f32
    %312 = vector.broadcast %cst_102 : f32 to vector<1x128xf32>
    %313 = arith.addf %312, %311 : vector<1x128xf32>
    %314 = arith.divf %312, %313 : vector<1x128xf32>
    %c0_i32_103 = arith.constant 0 : i32
    %c0_i32_104 = arith.constant 0 : i32
    %315 = tpu.memref_slice %arg2[%c1_i32, %c0_i32_103, %c0_i32_104] : memref<4x8x128xf32, #tpu.memory_space<vmem>> -> memref<1x8x128xf32, #tpu.memory_space<vmem>>
    %316 = tpu.memref_squeeze %315 : memref<1x8x128xf32, #tpu.memory_space<vmem>> -> memref<8x128xf32, #tpu.memory_space<vmem>>
    %317 = arith.index_cast %c6_i32 : i32 to index
    %c0_105 = arith.constant 0 : index
    %318 = vector.load %316[%317, %c0_105] : memref<8x128xf32, #tpu.memory_space<vmem>>, vector<1x128xf32>
    %319 = vector.broadcast %4 : f32 to vector<1x128xf32>
    %320 = arith.mulf %319, %302 : vector<1x128xf32>
    %321 = arith.addf %318, %320 : vector<1x128xf32>
    %322 = arith.negf %321 : vector<1x128xf32>
    %323 = math.exp %322 : vector<1x128xf32>
    %cst_106 = arith.constant 1.000000e+00 : f32
    %324 = vector.broadcast %cst_106 : f32 to vector<1x128xf32>
    %325 = arith.addf %324, %323 : vector<1x128xf32>
    %326 = arith.divf %324, %325 : vector<1x128xf32>
    %c0_i32_107 = arith.constant 0 : i32
    %c0_i32_108 = arith.constant 0 : i32
    %327 = tpu.memref_slice %arg2[%c3_i32, %c0_i32_107, %c0_i32_108] : memref<4x8x128xf32, #tpu.memory_space<vmem>> -> memref<1x8x128xf32, #tpu.memory_space<vmem>>
    %328 = tpu.memref_squeeze %327 : memref<1x8x128xf32, #tpu.memory_space<vmem>> -> memref<8x128xf32, #tpu.memory_space<vmem>>
    %329 = arith.index_cast %c6_i32 : i32 to index
    %c0_109 = arith.constant 0 : index
    %330 = vector.load %328[%329, %c0_109] : memref<8x128xf32, #tpu.memory_space<vmem>>, vector<1x128xf32>
    %331 = vector.broadcast %6 : f32 to vector<1x128xf32>
    %332 = arith.mulf %331, %302 : vector<1x128xf32>
    %333 = arith.addf %330, %332 : vector<1x128xf32>
    %334 = arith.negf %333 : vector<1x128xf32>
    %335 = math.exp %334 : vector<1x128xf32>
    %cst_110 = arith.constant 1.000000e+00 : f32
    %336 = vector.broadcast %cst_110 : f32 to vector<1x128xf32>
    %337 = arith.addf %336, %335 : vector<1x128xf32>
    %338 = arith.divf %336, %337 : vector<1x128xf32>
    %c0_i32_111 = arith.constant 0 : i32
    %c0_i32_112 = arith.constant 0 : i32
    %339 = tpu.memref_slice %arg2[%c2_i32, %c0_i32_111, %c0_i32_112] : memref<4x8x128xf32, #tpu.memory_space<vmem>> -> memref<1x8x128xf32, #tpu.memory_space<vmem>>
    %340 = tpu.memref_squeeze %339 : memref<1x8x128xf32, #tpu.memory_space<vmem>> -> memref<8x128xf32, #tpu.memory_space<vmem>>
    %341 = arith.index_cast %c6_i32 : i32 to index
    %c0_113 = arith.constant 0 : index
    %342 = vector.load %340[%341, %c0_113] : memref<8x128xf32, #tpu.memory_space<vmem>>, vector<1x128xf32>
    %343 = vector.broadcast %5 : f32 to vector<1x128xf32>
    %344 = arith.mulf %343, %302 : vector<1x128xf32>
    %345 = arith.addf %342, %344 : vector<1x128xf32>
    %346 = math.tanh %345 : vector<1x128xf32>
    %347 = arith.mulf %326, %300 : vector<1x128xf32>
    %348 = arith.mulf %314, %346 : vector<1x128xf32>
    %349 = arith.addf %347, %348 : vector<1x128xf32>
    %350 = math.tanh %349 : vector<1x128xf32>
    %351 = arith.mulf %338, %350 : vector<1x128xf32>
    %c7_i32 = arith.constant 7 : i32
    %c0_i32_114 = arith.constant 0 : i32
    %c0_i32_115 = arith.constant 0 : i32
    %352 = tpu.memref_slice %arg2[%c0_i32_5, %c0_i32_114, %c0_i32_115] : memref<4x8x128xf32, #tpu.memory_space<vmem>> -> memref<1x8x128xf32, #tpu.memory_space<vmem>>
    %353 = tpu.memref_squeeze %352 : memref<1x8x128xf32, #tpu.memory_space<vmem>> -> memref<8x128xf32, #tpu.memory_space<vmem>>
    %354 = arith.index_cast %c7_i32 : i32 to index
    %c0_116 = arith.constant 0 : index
    %355 = vector.load %353[%354, %c0_116] : memref<8x128xf32, #tpu.memory_space<vmem>>, vector<1x128xf32>
    %356 = vector.broadcast %3 : f32 to vector<1x128xf32>
    %357 = arith.mulf %356, %351 : vector<1x128xf32>
    %358 = arith.addf %355, %357 : vector<1x128xf32>
    %359 = arith.negf %358 : vector<1x128xf32>
    %360 = math.exp %359 : vector<1x128xf32>
    %cst_117 = arith.constant 1.000000e+00 : f32
    %361 = vector.broadcast %cst_117 : f32 to vector<1x128xf32>
    %362 = arith.addf %361, %360 : vector<1x128xf32>
    %363 = arith.divf %361, %362 : vector<1x128xf32>
    %c0_i32_118 = arith.constant 0 : i32
    %c0_i32_119 = arith.constant 0 : i32
    %364 = tpu.memref_slice %arg2[%c1_i32, %c0_i32_118, %c0_i32_119] : memref<4x8x128xf32, #tpu.memory_space<vmem>> -> memref<1x8x128xf32, #tpu.memory_space<vmem>>
    %365 = tpu.memref_squeeze %364 : memref<1x8x128xf32, #tpu.memory_space<vmem>> -> memref<8x128xf32, #tpu.memory_space<vmem>>
    %366 = arith.index_cast %c7_i32 : i32 to index
    %c0_120 = arith.constant 0 : index
    %367 = vector.load %365[%366, %c0_120] : memref<8x128xf32, #tpu.memory_space<vmem>>, vector<1x128xf32>
    %368 = vector.broadcast %4 : f32 to vector<1x128xf32>
    %369 = arith.mulf %368, %351 : vector<1x128xf32>
    %370 = arith.addf %367, %369 : vector<1x128xf32>
    %371 = arith.negf %370 : vector<1x128xf32>
    %372 = math.exp %371 : vector<1x128xf32>
    %cst_121 = arith.constant 1.000000e+00 : f32
    %373 = vector.broadcast %cst_121 : f32 to vector<1x128xf32>
    %374 = arith.addf %373, %372 : vector<1x128xf32>
    %375 = arith.divf %373, %374 : vector<1x128xf32>
    %c0_i32_122 = arith.constant 0 : i32
    %c0_i32_123 = arith.constant 0 : i32
    %376 = tpu.memref_slice %arg2[%c3_i32, %c0_i32_122, %c0_i32_123] : memref<4x8x128xf32, #tpu.memory_space<vmem>> -> memref<1x8x128xf32, #tpu.memory_space<vmem>>
    %377 = tpu.memref_squeeze %376 : memref<1x8x128xf32, #tpu.memory_space<vmem>> -> memref<8x128xf32, #tpu.memory_space<vmem>>
    %378 = arith.index_cast %c7_i32 : i32 to index
    %c0_124 = arith.constant 0 : index
    %379 = vector.load %377[%378, %c0_124] : memref<8x128xf32, #tpu.memory_space<vmem>>, vector<1x128xf32>
    %380 = vector.broadcast %6 : f32 to vector<1x128xf32>
    %381 = arith.mulf %380, %351 : vector<1x128xf32>
    %382 = arith.addf %379, %381 : vector<1x128xf32>
    %383 = arith.negf %382 : vector<1x128xf32>
    %384 = math.exp %383 : vector<1x128xf32>
    %cst_125 = arith.constant 1.000000e+00 : f32
    %385 = vector.broadcast %cst_125 : f32 to vector<1x128xf32>
    %386 = arith.addf %385, %384 : vector<1x128xf32>
    %387 = arith.divf %385, %386 : vector<1x128xf32>
    %c0_i32_126 = arith.constant 0 : i32
    %c0_i32_127 = arith.constant 0 : i32
    %388 = tpu.memref_slice %arg2[%c2_i32, %c0_i32_126, %c0_i32_127] : memref<4x8x128xf32, #tpu.memory_space<vmem>> -> memref<1x8x128xf32, #tpu.memory_space<vmem>>
    %389 = tpu.memref_squeeze %388 : memref<1x8x128xf32, #tpu.memory_space<vmem>> -> memref<8x128xf32, #tpu.memory_space<vmem>>
    %390 = arith.index_cast %c7_i32 : i32 to index
    %c0_128 = arith.constant 0 : index
    %391 = vector.load %389[%390, %c0_128] : memref<8x128xf32, #tpu.memory_space<vmem>>, vector<1x128xf32>
    %392 = vector.broadcast %5 : f32 to vector<1x128xf32>
    %393 = arith.mulf %392, %351 : vector<1x128xf32>
    %394 = arith.addf %391, %393 : vector<1x128xf32>
    %395 = math.tanh %394 : vector<1x128xf32>
    %396 = arith.mulf %375, %349 : vector<1x128xf32>
    %397 = arith.mulf %363, %395 : vector<1x128xf32>
    %398 = arith.addf %396, %397 : vector<1x128xf32>
    %399 = math.tanh %398 : vector<1x128xf32>
    %400 = arith.mulf %387, %399 : vector<1x128xf32>
    %c8_i32 = arith.constant 8 : i32
    %c0_129 = arith.constant 0 : index
    %c0_130 = arith.constant 0 : index
    %401 = vector.load %arg5[%c0_129, %c0_130] : memref<1x128xf32, #tpu.memory_space<vmem>>, vector<1x128xf32>
    tpu.vector_store %arg5[%c0_129, %c0_130], %400 {strides = array<i32>} : memref<1x128xf32, #tpu.memory_space<vmem>>, vector<1x128xf32>,
    %c0_131 = arith.constant 0 : index
    %c0_132 = arith.constant 0 : index
    %402 = vector.load %arg6[%c0_131, %c0_132] : memref<1x128xf32, #tpu.memory_space<vmem>>, vector<1x128xf32>
    tpu.vector_store %arg6[%c0_131, %c0_132], %398 {strides = array<i32>} : memref<1x128xf32, #tpu.memory_space<vmem>>, vector<1x128xf32>,
    %c0_133 = arith.constant 0 : index
    %c0_134 = arith.constant 0 : index
    %403 = vector.load %arg4[%c0_133, %c0_134] : memref<1x128xf32, #tpu.memory_space<vmem>>, vector<1x128xf32>
    tpu.vector_store %arg4[%c0_133, %c0_134], %400 {strides = array<i32>} : memref<1x128xf32, #tpu.memory_space<vmem>>, vector<1x128xf32>,
    return
  }
  func.func @transform_0(%arg0: i32, %arg1: i32) -> (i32, i32, i32) {
    %c0_i32 = arith.constant 0 : i32
    %c0_i32_0 = arith.constant 0 : i32
    return %c0_i32, %arg1, %arg0 : i32, i32, i32
  }
  func.func @transform_1(%arg0: i32, %arg1: i32) -> i32 {
    %c0_i32 = arith.constant 0 : i32
    %c0_i32_0 = arith.constant 0 : i32
    return %c0_i32 : i32
  }
  func.func @transform_2(%arg0: i32, %arg1: i32) -> (i32, i32) {
    %c0_i32 = arith.constant 0 : i32
    %c0_i32_0 = arith.constant 0 : i32
    return %c0_i32, %arg0 : i32, i32
  }
}

</mosaic_0001>

<llo_original>
// kernel: single_instrument_predictor_rnn_forward.1
$region0: #{single_instrument_predictor_rnn_forward.1}
  #allocation0 [shape = 'u32[]', space=smem, size = 0x4, offset = 0x4, fixed_abs, tag = 'smem constant byte address 0x4 - core index']
  #allocation1 [shape = 'u32[144,128]{1,0:T(1,128)}', space=vmem, size = 0x12000, scoped, tag = 'internal scratch']
  #allocation2 [shape = 'f32[1,128]{1,0:T(1,128)}', space=vmem, size = 0x200, scoped, tag = 'scratch operand']
  #allocation3 [shape = 'f32[1,128]{1,0:T(1,128)}', space=vmem, size = 0x200, scoped, tag = 'scratch operand']
  %s0 = inlined_call_operand.vmem [shape: f32[4,8,128], index: 0, kind: input, shape index: {}]
  %s1 = inlined_call_operand.vmem [shape: f32[4], index: 1, kind: input, shape index: {}]
  %s2 = inlined_call_operand.vmem [shape: f32[1,128], index: 2, kind: output, shape index: {}]
  %s3 = sld [smem:[#allocation0]]
  $region26: #{single_instrument_predictor_rnn_forward.1} parent=0
    _
  %s5 = ssub.s32 1, %s3
  %s6 = scalar_select 0, %s5, %s3
  $region1: #{single_instrument_predictor_rnn_forward.1} parent=0
    #allocation4 [shape = 'u8[512]{0}', space=smem, size = 0x200, scoped, tag = 'input window, operand 1, single buffered']
    #allocation5 [shape = 's32[1]{0}', space=sflag, size = 0x4, scoped, tag = 'scoped memory for single_instrument_predictor_rnn_forward.1']
    %7 = vsyncpa [#allocation5], 0
    // Predicated region
    $region2: #{single_instrument_predictor_rnn_forward.1} parent=1 // pred_check
      _
    $region3: #{single_instrument_predictor_rnn_forward.1} parent=1 // pred_check_branch
      %9 = sbr.rel (0) target = $region5
    $region4: #{single_instrument_predictor_rnn_forward.1} parent=1 // pred_region
      _
    $region5: #{single_instrument_predictor_rnn_forward.1} parent=1 // pred_fallthru
      _
    // Predicated region
    $region6: #{single_instrument_predictor_rnn_forward.1} parent=1 // pred_check
      _
    $region7: #{single_instrument_predictor_rnn_forward.1} parent=1 // pred_check_branch
      %11 = sbr.rel (0) target = $region9
    $region8: #{single_instrument_predictor_rnn_forward.1} parent=1 // pred_region
      %s13 = ssub.s32 16, 16
      %14 = vsyncadd [#allocation5], %s13
      %s16 = sshll.u32 %s1, 4
      %s17 = int_to_ptr.vmem [resolvable:$true] %s16
      %19 = dma.vmem_to_smem %s17, 16, [#allocation4], [#allocation5]
    $region9: #{single_instrument_predictor_rnn_forward.1} parent=1 // pred_fallthru
      _
    // Predicated region
    $region10: #{single_instrument_predictor_rnn_forward.1} parent=1 // pred_check
      _
    $region11: #{single_instrument_predictor_rnn_forward.1} parent=1 // pred_check_branch
      %21 = sbr.rel (0) target = $region13
    $region12: #{single_instrument_predictor_rnn_forward.1} parent=1 // pred_region
      %22 = dma.done [#allocation5], 16
    $region13: #{single_instrument_predictor_rnn_forward.1} parent=1 // pred_fallthru
      _
    %23 = sfence
    %p24 = scmp.eq.s32.totalorder 0, 0
    // Predicated region
    $region14: #{single_instrument_predictor_rnn_forward.1} parent=1 // pred_check
      %p25 = pneg %p24
    $region15: #{single_instrument_predictor_rnn_forward.1} parent=1 // pred_check_branch
      %27 = sbr.rel (%p25) target = $region17
    $region16: #{single_instrument_predictor_rnn_forward.1} parent=1 // pred_region
      %28 = vst [vmem:[#allocation2] sm:$0x1] 0.0
      %29 = vst [vmem:[#allocation3] sm:$0x1] 0.0
    $region17: #{single_instrument_predictor_rnn_forward.1} parent=1 // pred_fallthru
      _
    %s30 = sld [smem:[#allocation4]]
    %s31 = sld [smem:[#allocation4 + $0x1]]
    %s32 = sld [smem:[#allocation4 + $0x2]]
    %s33 = sld [smem:[#allocation4 + $0x3]]
    %v34 = vld [vmem:[#allocation2] sm:$0x1]
    %v35 = vld [vmem:[#allocation3] sm:$0x1]
    %v36 = vld [vmem:[%s0] sm:$0x1]
    %v37 = vstv %s30
    %v38 = vmul.f32 %v37, %v34
    %v39 = vadd.f32 %v36, %v38
    %v40 = vxor.u32 %v39, 2147483648
    %v41 = vmul.f32 %v40, 1.442695
    %v42 = vpow.pop %v41
    %v43 = vadd.f32 %v42, 1.0
    %v44 = vrcp.pop %v43
    %v45 = vmul.f32 1.0, %v44
    %s46 = scalar_lea.vmem %s0, 8
    %v47 = vld [vmem:[%s46] sm:$0x1]
    %v48 = vstv %s31
    %v49 = vmul.f32 %v48, %v34
    %v50 = vadd.f32 %v47, %v49
    %v51 = vxor.u32 %v50, 2147483648
    %v52 = vmul.f32 %v51, 1.442695
    %v53 = vpow.pop %v52
    %v54 = vadd.f32 %v53, 1.0
    %v55 = vrcp.pop %v54
    %v56 = vmul.f32 1.0, %v55
    %s57 = scalar_lea.vmem %s0, 24
    %v58 = vld [vmem:[%s57] sm:$0x1]
    %v59 = vstv %s33
    %v60 = vmul.f32 %v59, %v34
    %v61 = vadd.f32 %v58, %v60
    %v62 = vxor.u32 %v61, 2147483648
    %v63 = vmul.f32 %v62, 1.442695
    %v64 = vpow.pop %v63
    %v65 = vadd.f32 %v64, 1.0
    %v66 = vrcp.pop %v65
    %v67 = vmul.f32 1.0, %v66
    %s68 = scalar_lea.vmem %s0, 16
    %v69 = vld [vmem:[%s68] sm:$0x1]
    %v70 = vstv %s32
    %v71 = vmul.f32 %v70, %v34
    %v72 = vadd.f32 %v69, %v71
    %v73 = vtanh.pop %v72
    %v74 = vmul.f32 %v56, %v35
    %v75 = vmul.f32 %v45, %v73
    %v76 = vadd.f32 %v74, %v75
    %v77 = vtanh.pop %v76
    %v78 = vmul.f32 %v67, %v77
    %v79 = vld [vmem:[%s0 + $0x1] sm:$0x1]
    %v80 = vmul.f32 %v37, %v78
    %v81 = vadd.f32 %v79, %v80
    %v82 = vxor.u32 %v81, 2147483648
    %v83 = vmul.f32 %v82, 1.442695
    %v84 = vpow.pop %v83
    %v85 = vadd.f32 %v84, 1.0
    %v86 = vrcp.pop %v85
    %v87 = vmul.f32 1.0, %v86
    %v88 = vld [vmem:[%s46 + $0x1] sm:$0x1]
    %v89 = vmul.f32 %v48, %v78
    %v90 = vadd.f32 %v88, %v89
    %v91 = vxor.u32 %v90, 2147483648
    %v92 = vmul.f32 %v91, 1.442695
    %v93 = vpow.pop %v92
    %v94 = vadd.f32 %v93, 1.0
    %v95 = vrcp.pop %v94
    %v96 = vmul.f32 1.0, %v95
    %v97 = vld [vmem:[%s57 + $0x1] sm:$0x1]
    %v98 = vmul.f32 %v59, %v78
    %v99 = vadd.f32 %v97, %v98
    %v100 = vxor.u32 %v99, 2147483648
    %v101 = vmul.f32 %v100, 1.442695
    %v102 = vpow.pop %v101
    %v103 = vadd.f32 %v102, 1.0
    %v104 = vrcp.pop %v103
    %v105 = vmul.f32 1.0, %v104
    %v106 = vld [vmem:[%s68 + $0x1] sm:$0x1]
    %v107 = vmul.f32 %v70, %v78
    %v108 = vadd.f32 %v106, %v107
    %v109 = vtanh.pop %v108
    %v110 = vmul.f32 %v96, %v76
    %v111 = vmul.f32 %v87, %v109
    %v112 = vadd.f32 %v110, %v111
    %v113 = vtanh.pop %v112
    %v114 = vmul.f32 %v105, %v113
    %v115 = vld [vmem:[%s0 + $0x2] sm:$0x1]
    %v116 = vmul.f32 %v37, %v114
    %v117 = vadd.f32 %v115, %v116
    %v118 = vxor.u32 %v117, 2147483648
    %v119 = vmul.f32 %v118, 1.442695
    %v120 = vpow.pop %v119
    %v121 = vadd.f32 %v120, 1.0
    %v122 = vrcp.pop %v121
    %v123 = vmul.f32 1.0, %v122
    %v124 = vld [vmem:[%s46 + $0x2] sm:$0x1]
    %v125 = vmul.f32 %v48, %v114
    %v126 = vadd.f32 %v124, %v125
    %v127 = vxor.u32 %v126, 2147483648
    %v128 = vmul.f32 %v127, 1.442695
    %v129 = vpow.pop %v128
    %v130 = vadd.f32 %v129, 1.0
    %v131 = vrcp.pop %v130
    %v132 = vmul.f32 1.0, %v131
    %v133 = vld [vmem:[%s57 + $0x2] sm:$0x1]
    %v134 = vmul.f32 %v59, %v114
    %v135 = vadd.f32 %v133, %v134
    %v136 = vxor.u32 %v135, 2147483648
    %v137 = vmul.f32 %v136, 1.442695
    %v138 = vpow.pop %v137
    %v139 = vadd.f32 %v138, 1.0
    %v140 = vrcp.pop %v139
    %v141 = vmul.f32 1.0, %v140
    %v142 = vld [vmem:[%s68 + $0x2] sm:$0x1]
    %v143 = vmul.f32 %v70, %v114
    %v144 = vadd.f32 %v142, %v143
    %v145 = vtanh.pop %v144
    %v146 = vmul.f32 %v132, %v112
    %v147 = vmul.f32 %v123, %v145
    %v148 = vadd.f32 %v146, %v147
    %v149 = vtanh.pop %v148
    %v150 = vmul.f32 %v141, %v149
    %v151 = vld [vmem:[%s0 + $0x3] sm:$0x1]
    %v152 = vmul.f32 %v37, %v150
    %v153 = vadd.f32 %v151, %v152
    %v154 = vxor.u32 %v153, 2147483648
    %v155 = vmul.f32 %v154, 1.442695
    %v156 = vpow.pop %v155
    %v157 = vadd.f32 %v156, 1.0
    %v158 = vrcp.pop %v157
    %v159 = vmul.f32 1.0, %v158
    %v160 = vld [vmem:[%s46 + $0x3] sm:$0x1]
    %v161 = vmul.f32 %v48, %v150
    %v162 = vadd.f32 %v160, %v161
    %v163 = vxor.u32 %v162, 2147483648
    %v164 = vmul.f32 %v163, 1.442695
    %v165 = vpow.pop %v164
    %v166 = vadd.f32 %v165, 1.0
    %v167 = vrcp.pop %v166
    %v168 = vmul.f32 1.0, %v167
    %v169 = vld [vmem:[%s57 + $0x3] sm:$0x1]
    %v170 = vmul.f32 %v59, %v150
    %v171 = vadd.f32 %v169, %v170
    %v172 = vxor.u32 %v171, 2147483648
    %v173 = vmul.f32 %v172, 1.442695
    %v174 = vpow.pop %v173
    %v175 = vadd.f32 %v174, 1.0
    %v176 = vrcp.pop %v175
    %v177 = vmul.f32 1.0, %v176
    %v178 = vld [vmem:[%s68 + $0x3] sm:$0x1]
    %v179 = vmul.f32 %v70, %v150
    %v180 = vadd.f32 %v178, %v179
    %v181 = vtanh.pop %v180
    %v182 = vmul.f32 %v168, %v148
    %v183 = vmul.f32 %v159, %v181
    %v184 = vadd.f32 %v182, %v183
    %v185 = vtanh.pop %v184
    %v186 = vmul.f32 %v177, %v185
    %v187 = vld [vmem:[%s0 + $0x4] sm:$0x1]
    %v188 = vmul.f32 %v37, %v186
    %v189 = vadd.f32 %v187, %v188
    %v190 = vxor.u32 %v189, 2147483648
    %v191 = vmul.f32 %v190, 1.442695
    %v192 = vpow.pop %v191
    %v193 = vadd.f32 %v192, 1.0
    %v194 = vrcp.pop %v193
    %v195 = vmul.f32 1.0, %v194
    %v196 = vld [vmem:[%s46 + $0x4] sm:$0x1]
    %v197 = vmul.f32 %v48, %v186
    %v198 = vadd.f32 %v196, %v197
    %v199 = vxor.u32 %v198, 2147483648
    %v200 = vmul.f32 %v199, 1.442695
    %v201 = vpow.pop %v200
    %v202 = vadd.f32 %v201, 1.0
    %v203 = vrcp.pop %v202
    %v204 = vmul.f32 1.0, %v203
    %v205 = vld [vmem:[%s57 + $0x4] sm:$0x1]
    %v206 = vmul.f32 %v59, %v186
    %v207 = vadd.f32 %v205, %v206
    %v208 = vxor.u32 %v207, 2147483648
    %v209 = vmul.f32 %v208, 1.442695
    %v210 = vpow.pop %v209
    %v211 = vadd.f32 %v210, 1.0
    %v212 = vrcp.pop %v211
    %v213 = vmul.f32 1.0, %v212
    %v214 = vld [vmem:[%s68 + $0x4] sm:$0x1]
    %v215 = vmul.f32 %v70, %v186
    %v216 = vadd.f32 %v214, %v215
    %v217 = vtanh.pop %v216
    %v218 = vmul.f32 %v204, %v184
    %v219 = vmul.f32 %v195, %v217
    %v220 = vadd.f32 %v218, %v219
    %v221 = vtanh.pop %v220
    %v222 = vmul.f32 %v213, %v221
    %v223 = vld [vmem:[%s0 + $0x5] sm:$0x1]
    %v224 = vmul.f32 %v37, %v222
    %v225 = vadd.f32 %v223, %v224
    %v226 = vxor.u32 %v225, 2147483648
    %v227 = vmul.f32 %v226, 1.442695
    %v228 = vpow.pop %v227
    %v229 = vadd.f32 %v228, 1.0
    %v230 = vrcp.pop %v229
    %v231 = vmul.f32 1.0, %v230
    %v232 = vld [vmem:[%s46 + $0x5] sm:$0x1]
    %v233 = vmul.f32 %v48, %v222
    %v234 = vadd.f32 %v232, %v233
    %v235 = vxor.u32 %v234, 2147483648
    %v236 = vmul.f32 %v235, 1.442695
    %v237 = vpow.pop %v236
    %v238 = vadd.f32 %v237, 1.0
    %v239 = vrcp.pop %v238
    %v240 = vmul.f32 1.0, %v239
    %v241 = vld [vmem:[%s57 + $0x5] sm:$0x1]
    %v242 = vmul.f32 %v59, %v222
    %v243 = vadd.f32 %v241, %v242
    %v244 = vxor.u32 %v243, 2147483648
    %v245 = vmul.f32 %v244, 1.442695
    %v246 = vpow.pop %v245
    %v247 = vadd.f32 %v246, 1.0
    %v248 = vrcp.pop %v247
    %v249 = vmul.f32 1.0, %v248
    %v250 = vld [vmem:[%s68 + $0x5] sm:$0x1]
    %v251 = vmul.f32 %v70, %v222
    %v252 = vadd.f32 %v250, %v251
    %v253 = vtanh.pop %v252
    %v254 = vmul.f32 %v240, %v220
    %v255 = vmul.f32 %v231, %v253
    %v256 = vadd.f32 %v254, %v255
    %v257 = vtanh.pop %v256
    %v258 = vmul.f32 %v249, %v257
    %v259 = vld [vmem:[%s0 + $0x6] sm:$0x1]
    %v260 = vmul.f32 %v37, %v258
    %v261 = vadd.f32 %v259, %v260
    %v262 = vxor.u32 %v261, 2147483648
    %v263 = vmul.f32 %v262, 1.442695
    %v264 = vpow.pop %v263
    %v265 = vadd.f32 %v264, 1.0
    %v266 = vrcp.pop %v265
    %v267 = vmul.f32 1.0, %v266
    %v268 = vld [vmem:[%s46 + $0x6] sm:$0x1]
    %v269 = vmul.f32 %v48, %v258
    %v270 = vadd.f32 %v268, %v269
    %v271 = vxor.u32 %v270, 2147483648
    %v272 = vmul.f32 %v271, 1.442695
    %v273 = vpow.pop %v272
    %v274 = vadd.f32 %v273, 1.0
    %v275 = vrcp.pop %v274
    %v276 = vmul.f32 1.0, %v275
    %v277 = vld [vmem:[%s57 + $0x6] sm:$0x1]
    %v278 = vmul.f32 %v59, %v258
    %v279 = vadd.f32 %v277, %v278
    %v280 = vxor.u32 %v279, 2147483648
    %v281 = vmul.f32 %v280, 1.442695
    %v282 = vpow.pop %v281
    %v283 = vadd.f32 %v282, 1.0
    %v284 = vrcp.pop %v283
    %v285 = vmul.f32 1.0, %v284
    %v286 = vld [vmem:[%s68 + $0x6] sm:$0x1]
    %v287 = vmul.f32 %v70, %v258
    %v288 = vadd.f32 %v286, %v287
    %v289 = vtanh.pop %v288
    %v290 = vmul.f32 %v276, %v256
    %v291 = vmul.f32 %v267, %v289
    %v292 = vadd.f32 %v290, %v291
    %v293 = vtanh.pop %v292
    %v294 = vmul.f32 %v285, %v293
    %v295 = vld [vmem:[%s0 + $0x7] sm:$0x1]
    %v296 = vmul.f32 %v37, %v294
    %v297 = vadd.f32 %v295, %v296
    %v298 = vxor.u32 %v297, 2147483648
    %v299 = vmul.f32 %v298, 1.442695
    %v300 = vpow.pop %v299
    %v301 = vadd.f32 %v300, 1.0
    %v302 = vrcp.pop %v301
    %v303 = vmul.f32 1.0, %v302
    %v304 = vld [vmem:[%s46 + $0x7] sm:$0x1]
    %v305 = vmul.f32 %v48, %v294
    %v306 = vadd.f32 %v304, %v305
    %v307 = vxor.u32 %v306, 2147483648
    %v308 = vmul.f32 %v307, 1.442695
    %v309 = vpow.pop %v308
    %v310 = vadd.f32 %v309, 1.0
    %v311 = vrcp.pop %v310
    %v312 = vmul.f32 1.0, %v311
    %v313 = vld [vmem:[%s57 + $0x7] sm:$0x1]
    %v314 = vmul.f32 %v59, %v294
    %v315 = vadd.f32 %v313, %v314
    %v316 = vxor.u32 %v315, 2147483648
    %v317 = vmul.f32 %v316, 1.442695
    %v318 = vpow.pop %v317
    %v319 = vadd.f32 %v318, 1.0
    %v320 = vrcp.pop %v319
    %v321 = vmul.f32 1.0, %v320
    %v322 = vld [vmem:[%s68 + $0x7] sm:$0x1]
    %v323 = vmul.f32 %v70, %v294
    %v324 = vadd.f32 %v322, %v323
    %v325 = vtanh.pop %v324
    %v326 = vmul.f32 %v312, %v292
    %v327 = vmul.f32 %v303, %v325
    %v328 = vadd.f32 %v326, %v327
    %v329 = vtanh.pop %v328
    %v330 = vmul.f32 %v321, %v329
    %331 = vst [vmem:[#allocation2] sm:$0x1] %v330
    %332 = vst [vmem:[#allocation3] sm:$0x1] %v328
    %333 = vst [vmem:[%s2] sm:$0x1] %v330
    // Predicated region
    $region18: #{single_instrument_predictor_rnn_forward.1} parent=1 // pred_check
      _
    $region19: #{single_instrument_predictor_rnn_forward.1} parent=1 // pred_check_branch
      %335 = sbr.rel (0) target = $region21
    $region20: #{single_instrument_predictor_rnn_forward.1} parent=1 // pred_region
      _
    $region21: #{single_instrument_predictor_rnn_forward.1} parent=1 // pred_fallthru
      _
    // Predicated region
    $region22: #{single_instrument_predictor_rnn_forward.1} parent=1 // pred_check
      _
    $region23: #{single_instrument_predictor_rnn_forward.1} parent=1 // pred_check_branch
      %337 = sbr.rel (0) target = $region25
    $region24: #{single_instrument_predictor_rnn_forward.1} parent=1 // pred_region
      _
    $region25: #{single_instrument_predictor_rnn_forward.1} parent=1 // pred_fallthru
      _
    %338 = vsyncpa [#allocation5], 1

</llo_original>
